<compile_context>
chip_gen: v6e
topology: v6e:2x2x1
jax: 0.10.0
libtpu: 0.0.40
codegen_flags: <defaults>
</compile_context>

<pallas_src>
import functools

import jax
import jax.numpy as jnp
from jax.experimental import pallas as pl
from jax.experimental.pallas import tpu as pltpu


HIDDEN = 128   # self.n_layers in the PyTorch module
HEAD_W = 128   # fused + lane-padded head matmul width (mean | sigma | value | zeros)


def _round_up(n, m):
    return ((n + m - 1) // m) * m


# Packed parameter slab layout (all rows 128 lanes wide, f32, 8-aligned sections):
#   rows [0, obs_pad)                 : W1   (padded from obs_dim rows)
#   row  obs_pad                      : b1   (section padded to 8 rows)
#   rows [obs_pad+8,   obs_pad+136)   : W2
#   row  obs_pad+136                  : b2   (section padded to 8 rows)
#   rows [obs_pad+144, obs_pad+272)   : Wh = [Wm | Ws | Wv | 0]
#   row  obs_pad+272                  : bh = [bm | bs | bv | 0] (padded to 8 rows)
#   K = obs_pad + 280
def _agent_kernel(x_ref, p_ref, out_ref, *, obs_pad, act_dim, out_w, cast_dtype):
    f32 = jnp.float32

    # Static, 8-aligned f32 slab slices -> free ref views / cheap vector loads.
    # Weights are cast to the MXU operand dtype in-kernel (slab stays f32 so
    # there is no bf16 sublane-retiling and biases remain exact f32).
    w1 = p_ref[0:obs_pad, :].astype(cast_dtype)
    b1 = p_ref[obs_pad:obs_pad + 1, :]
    w2 = p_ref[obs_pad + 8:obs_pad + 136, :].astype(cast_dtype)
    b2 = p_ref[obs_pad + 136:obs_pad + 137, :]
    wh = p_ref[obs_pad + 144:obs_pad + 272, :].astype(cast_dtype)
    bh = p_ref[obs_pad + 272:obs_pad + 273, :]

    x = x_ref[...].astype(cast_dtype)

    # Trunk MLP on the MXU; accumulate + bias + ReLU in f32, cast back to the
    # operand dtype only at the matmul inputs.
    h1 = jnp.dot(x, w1, preferred_element_type=f32) + b1
    h1 = jnp.maximum(h1, 0.0).astype(cast_dtype)
    h2 = jnp.dot(h1, w2, preferred_element_type=f32) + b2
    h2 = jnp.maximum(h2, 0.0).astype(cast_dtype)

    # One fused, lane-dense head matmul: columns [mean | sigma | value | pad].
    z = jnp.dot(h2, wh, preferred_element_type=f32) + bh       # [tb, 128] f32

    # Only the first out_w lanes are meaningful -> narrow store (8-16x less
    # HBM writeback than the full 128-lane f32 slab).
    zo = z[:, :out_w]
    col = jax.lax.broadcasted_iota(jnp.int32, zo.shape, 1)
    sigma_mask = (col >= act_dim) & (col < 2 * act_dim)
    out_ref[...] = jnp.where(sigma_mask, jax.nn.sigmoid(zo), zo)


def pack_params(params, obs_dim):
    """Pack all weights/biases into one [obs_pad + 280, 128] f32 slab (one DMA)."""
    act_dim = params["wm"].shape[1]
    assert 2 * act_dim + 1 <= HEAD_W, "fused head must fit in 128 lanes"
    obs_pad = _round_up(max(obs_dim, 1), 8)

    def pad_rows(a, rows):
        return jnp.pad(a, ((0, rows - a.shape[0]), (0, 0)))

    w1 = pad_rows(params["w1"].astype(jnp.float32), obs_pad)
    b1 = pad_rows(params["b1"].reshape(1, HIDDEN).astype(jnp.float32), 8)
    w2 = params["w2"].astype(jnp.float32)
    b2 = pad_rows(params["b2"].reshape(1, HIDDEN).astype(jnp.float32), 8)

    wh = jnp.zeros((HIDDEN, HEAD_W), jnp.float32)
    wh = wh.at[:, 0:act_dim].set(params["wm"])
    wh = wh.at[:, act_dim:2 * act_dim].set(params["ws"])
    wh = wh.at[:, 2 * act_dim:2 * act_dim + 1].set(params["wv"])

    bh = jnp.zeros((1, HEAD_W), jnp.float32)
    bh = bh.at[:, 0:act_dim].set(params["bm"].reshape(1, act_dim))
    bh = bh.at[:, act_dim:2 * act_dim].set(params["bs"].reshape(1, act_dim))
    bh = bh.at[:, 2 * act_dim:2 * act_dim + 1].set(params["bv"].reshape(1, 1))
    bh = pad_rows(bh, 8)

    return jnp.concatenate([w1, b1, w2, b2, wh, bh], axis=0)


def _forward_impl(x, packed, *, act_dim, block_b=4096, use_bf16=True, min_steps=1):
    """Runs the fused kernel; returns the packed (B, out_w) head block
    [mean | sigma | value | pad] in f32."""
    B, obs_dim = x.shape
    obs_pad = _round_up(max(obs_dim, 1), 8)
    K = obs_pad + 280
    assert packed.shape == (K, HEAD_W), (packed.shape, (K, HEAD_W))
    assert 2 * act_dim + 1 <= HEAD_W
    out_w = min(HEAD_W, _round_up(2 * act_dim + 1, 8))

    xp = x.astype(jnp.float32)
    # Pad feature dim so every slab offset stays 8-aligned; the padded columns
    # multiply zero weight rows so results are unchanged.
    if obs_pad != obs_dim:
        xp = jnp.pad(xp, ((0, 0), (0, obs_pad - obs_dim)))

    # Balanced batch tiles (minimize tail padding). min_steps=2 on v7x makes
    # the "parallel" grid axis shardable across its two TensorCores.
    n_steps = max(min_steps, pl.cdiv(B, block_b))
    tb = _round_up(pl.cdiv(B, n_steps), 8)
    grid_steps = pl.cdiv(B, tb)
    Bp = tb * grid_steps
    if Bp != B:
        xp = jnp.pad(xp, ((0, Bp - B), (0, 0)))

    flops = 2 * Bp * HIDDEN * (obs_pad + 2 * HIDDEN)
    bytes_accessed = Bp * obs_pad * 4 + K * HEAD_W * 4 + Bp * out_w * 4

    out = pl.pallas_call(
        functools.partial(
            _agent_kernel, obs_pad=obs_pad, act_dim=act_dim, out_w=out_w,
            cast_dtype=jnp.bfloat16 if use_bf16 else jnp.float32),
        out_shape=jax.ShapeDtypeStruct((Bp, out_w), jnp.float32),
        grid_spec=pltpu.PrefetchScalarGridSpec(
            num_scalar_prefetch=0,
            grid=(grid_steps,),
            in_specs=[
                pl.BlockSpec((tb, obs_pad), lambda i: (i, 0)),
                # Constant index_map -> parameter slab stays VMEM-resident.
                pl.BlockSpec((K, HEAD_W), lambda i: (0, 0)),
            ],
            out_specs=pl.BlockSpec((tb, out_w), lambda i: (i, 0)),
        ),
        compiler_params=pltpu.CompilerParams(
            dimension_semantics=("parallel",),
            # Big tiles overflow v5e's 16 MiB (and v6e/v7x 32 MiB) default
            # scoped VMEM; 48 MiB still fits under v7x's 64 MiB physical VMEM.
            vmem_limit_bytes=48 * 1024 * 1024,
        ),
        cost_estimate=pl.CostEstimate(
            flops=flops,
            transcendentals=Bp * act_dim,
            bytes_accessed=bytes_accessed),
    )(xp, packed)

    # Skip the row slice entirely when there was no batch padding.
    return out if Bp == B else out[:B]


# Packed-output entry point: no post-kernel head slices (consumers slice lazily).
combined_agent_forward_packed = jax.jit(
    _forward_impl, static_argnames=("act_dim", "block_b", "use_bf16", "min_steps"))


@functools.partial(
    jax.jit, static_argnames=("act_dim", "block_b", "use_bf16", "min_steps"))
def combined_agent_forward(x, packed, *, act_dim, block_b=4096, use_bf16=True,
                           min_steps=1):
    """Fused CombinedAgent forward. Returns (mean_action, sigma_action, value)."""
    out = _forward_impl(x, packed, act_dim=act_dim, block_b=block_b,
                        use_bf16=use_bf16, min_steps=min_steps)
    mean = out[:, 0:act_dim]
    sigma = out[:, act_dim:2 * act_dim]
    value = out[:, 2 * act_dim:2 * act_dim + 1]
    return mean, sigma, value


def _orthogonal_init(key, shape, gain):
    """Orthogonal init matching torch.nn.init.orthogonal_'s scheme."""
    rows, cols = shape
    n = max(rows, cols)
    a = jax.random.normal(key, (n, n), dtype=jnp.float32)
    q, r = jnp.linalg.qr(a)
    q = q * jnp.sign(jnp.diag(r))
    return gain * q[:rows, :cols]


def init_params(key, obs_dim, act_dim):
    """Weights matching CombinedAgent.__init__:
    layer_init (orthogonal std=sqrt(2), bias=0) for linear1/linear2;
    heads use PyTorch nn.Linear default uniform(-1/sqrt(fan_in), 1/sqrt(fan_in)).
    Weights stored as [in, out] (transposed vs. nn.Linear); biases as [1, out].
    """
    k1, k2, k3, k4, k5, k6, k7, k8 = jax.random.split(key, 8)
    gain = jnp.sqrt(2.0)
    bound = 1.0 / jnp.sqrt(HIDDEN)
    u = lambda k, shape: jax.random.uniform(
        k, shape, jnp.float32, minval=-bound, maxval=bound)
    return {
        "w1": _orthogonal_init(k1, (obs_dim, HIDDEN), gain),
        "b1": jnp.zeros((1, HIDDEN), jnp.float32),
        "w2": _orthogonal_init(k2, (HIDDEN, HIDDEN), gain),
        "b2": jnp.zeros((1, HIDDEN), jnp.float32),
        "wm": u(k3, (HIDDEN, act_dim)),
        "bm": u(k4, (1, act_dim)),
        "ws": u(k5, (HIDDEN, act_dim)),
        "bs": u(k6, (1, act_dim)),
        "wv": u(k7, (HIDDEN, 1)),
        "bv": u(k8, (1, 1)),
    }


def _reference_forward(x, p):
    h1 = jnp.maximum(x @ p["w1"] + p["b1"], 0.0)
    h2 = jnp.maximum(h1 @ p["w2"] + p["b2"], 0.0)
    mean = h2 @ p["wm"] + p["bm"]
    sigma = jax.nn.sigmoid(h2 @ p["ws"] + p["bs"])
    value = h2 @ p["wv"] + p["bv"]
    return mean, sigma, value


if __name__ == "__main__":
    key = jax.random.PRNGKey(0)
    k_x, k_p, k_x2 = jax.random.split(key, 3)

    obs_dim = 8    # env.observation_space.shape[0]
    act_dim = 4    # env.action_space.shape[0]

    params = init_params(k_p, obs_dim, act_dim)
    packed = pack_params(params, obs_dim)

    # --- Small-batch (acting) path, exact f32 MXU operands, tight tolerance. ---
    x_small = jax.random.normal(k_x, (8, obs_dim), dtype=jnp.float32)
    mean, sigma, value = combined_agent_forward(
        x_small, packed, act_dim=act_dim, use_bf16=False)
    jax.block_until_ready((mean, sigma, value))
    rm, rs, rv = _reference_forward(x_small, params)
    assert mean.shape == (8, act_dim)
    assert sigma.shape == (8, act_dim)
    assert value.shape == (8, 1)
    assert jnp.allclose(mean, rm, atol=1e-4, rtol=1e-4)
    assert jnp.allclose(sigma, rs, atol=1e-4, rtol=1e-4)
    assert jnp.allclose(value, rv, atol=1e-4, rtol=1e-4)

    # --- Default path (bf16 MXU operands, f32 biases/accum), small batch. ---
    mbf, sbf, vbf = combined_agent_forward(x_small, packed, act_dim=act_dim)
    jax.block_until_ready((mbf, sbf, vbf))
    assert jnp.allclose(mbf, rm, atol=1e-1)
    assert jnp.allclose(sbf, rs, atol=1e-1)
    assert jnp.allclose(vbf, rv, atol=1e-1)

    # --- Larger batch: balanced multi-step grid (min_steps=2 exercises the
    #     parallel grid axis / v7x two-TC sharding path) + batch-pad tail. ---
    x_big = jax.random.normal(k_x2, (1000, obs_dim), dtype=jnp.float32)
    rmb, rsb, rvb = _reference_forward(x_big, params)

    mb32, sb32, vb32 = combined_agent_forward(
        x_big, packed, act_dim=act_dim, use_bf16=False, min_steps=2)
    jax.block_until_ready((mb32, sb32, vb32))
    assert jnp.allclose(mb32, rmb, atol=1e-4, rtol=1e-4)
    assert jnp.allclose(sb32, rsb, atol=1e-4, rtol=1e-4)
    assert jnp.allclose(vb32, rvb, atol=1e-4, rtol=1e-4)

    mbb, sbb, vbb = combined_agent_forward(
        x_big, packed, act_dim=act_dim, min_steps=2)   # bf16 default
    jax.block_until_ready((mbb, sbb, vbb))
    assert jnp.allclose(mbb, rmb, atol=1e-1)
    assert jnp.allclose(sbb, rsb, atol=1e-1)
    assert jnp.allclose(vbb, rvb, atol=1e-1)

    # --- Packed-output entry point (no post-kernel head slices). ---
    out_packed = combined_agent_forward_packed(x_big, packed, act_dim=act_dim)
    jax.block_until_ready(out_packed)
    assert out_packed.shape == (1000, 16)
    assert jnp.allclose(out_packed[:, :act_dim], rmb, atol=1e-1)

    print("KERNEL_OK")
</pallas_src>

<mosaic_0001>
module attributes {stable_mosaic.version = 11 : i64} {
  func.func @_agent_kernel(%arg0: i32, %arg1: memref<8x8xf32, #tpu.memory_space<vmem>>, %arg2: memref<288x128xf32, #tpu.memory_space<vmem>>, %arg3: memref<8x16xf32, #tpu.memory_space<vmem>>) attributes {dimension_semantics = [#tpu.dimension_semantics<parallel>], iteration_bounds = array<i64: 1>, scalar_prefetch = 0 : i64, scratch_operands = 0 : i64, tpu.core_type = #tpu.core_type<tc>, window_params = [{transform_indices = @transform_0, window_bounds = array<i64: 8, 8>}, {pipeline_mode = #tpu.pipeline_mode<synchronous>, transform_indices = @transform_1, window_bounds = array<i64: 288, 128>}, {transform_indices = @transform_2, window_bounds = array<i64: 8, 16>}]} {
    %c0 = arith.constant 0 : index
    %c0_0 = arith.constant 0 : index
    %0 = vector.load %arg2[%c0, %c0_0] : memref<288x128xf32, #tpu.memory_space<vmem>>, vector<8x128xf32>
    %c8 = arith.constant 8 : index
    %c0_1 = arith.constant 0 : index
    %1 = vector.load %arg2[%c8, %c0_1] : memref<288x128xf32, #tpu.memory_space<vmem>>, vector<1x128xf32>
    %c16 = arith.constant 16 : index
    %c0_2 = arith.constant 0 : index
    %2 = vector.load %arg2[%c16, %c0_2] : memref<288x128xf32, #tpu.memory_space<vmem>>, vector<128x128xf32>
    %c144 = arith.constant 144 : index
    %c0_3 = arith.constant 0 : index
    %3 = vector.load %arg2[%c144, %c0_3] : memref<288x128xf32, #tpu.memory_space<vmem>>, vector<1x128xf32>
    %c152 = arith.constant 152 : index
    %c0_4 = arith.constant 0 : index
    %4 = vector.load %arg2[%c152, %c0_4] : memref<288x128xf32, #tpu.memory_space<vmem>>, vector<128x128xf32>
    %c280 = arith.constant 280 : index
    %c0_5 = arith.constant 0 : index
    %5 = vector.load %arg2[%c280, %c0_5] : memref<288x128xf32, #tpu.memory_space<vmem>>, vector<1x128xf32>
    %c0_6 = arith.constant 0 : index
    %c0_7 = arith.constant 0 : index
    %6 = vector.load %arg1[%c0_6, %c0_7] : memref<8x8xf32, #tpu.memory_space<vmem>>, vector<8x8xf32>
    %cst = arith.constant dense<0.000000e+00> : vector<8x128xf32>
    %7 = tpu.matmul %6, %0, %cst {dimension_numbers = #tpu.dot_dimension_numbers<[1], [0], [0], [1], [0, 0, 1, 1], [], []>} : vector<8x8xf32>, vector<8x128xf32>, vector<8x128xf32> -> vector<8x128xf32>
    %8 = vector.broadcast %1 : vector<1x128xf32> to vector<8x128xf32>
    %9 = arith.addf %7, %8 : vector<8x128xf32>
    %cst_8 = arith.constant 0.000000e+00 : f32
    %10 = vector.broadcast %cst_8 : f32 to vector<8x128xf32>
    %11 = arith.maximumf %9, %10 : vector<8x128xf32>
    %cst_9 = arith.constant dense<0.000000e+00> : vector<8x128xf32>
    %12 = tpu.matmul %11, %2, %cst_9 {dimension_numbers = #tpu.dot_dimension_numbers<[1], [0], [0], [1], [0, 0, 1, 1], [], []>} : vector<8x128xf32>, vector<128x128xf32>, vector<8x128xf32> -> vector<8x128xf32>
    %13 = vector.broadcast %3 : vector<1x128xf32> to vector<8x128xf32>
    %14 = arith.addf %12, %13 : vector<8x128xf32>
    %cst_10 = arith.constant 0.000000e+00 : f32
    %15 = vector.broadcast %cst_10 : f32 to vector<8x128xf32>
    %16 = arith.maximumf %14, %15 : vector<8x128xf32>
    %cst_11 = arith.constant dense<0.000000e+00> : vector<8x128xf32>
    %17 = tpu.matmul %16, %4, %cst_11 {dimension_numbers = #tpu.dot_dimension_numbers<[1], [0], [0], [1], [0, 0, 1, 1], [], []>} : vector<8x128xf32>, vector<128x128xf32>, vector<8x128xf32> -> vector<8x128xf32>
    %18 = vector.broadcast %5 : vector<1x128xf32> to vector<8x128xf32>
    %19 = arith.addf %17, %18 : vector<8x128xf32>
    %20 = vector.extract_strided_slice %19 {offsets = [0, 0], sizes = [8, 16], strides = [1, 1]} : vector<8x128xf32> to vector<8x16xf32>
    %21 = tpu.iota {dimensions = array<i32: 1>} : vector<8x16xi32>
    %c4_i32 = arith.constant 4 : i32
    %22 = vector.broadcast %c4_i32 : i32 to vector<8x16xi32>
    %23 = arith.cmpi sge, %21, %22 : vector<8x16xi32>
    %c8_i32 = arith.constant 8 : i32
    %24 = vector.broadcast %c8_i32 : i32 to vector<8x16xi32>
    %25 = arith.cmpi slt, %21, %24 : vector<8x16xi32>
    %26 = arith.andi %23, %25 : vector<8x16xi1>
    %27 = arith.negf %20 : vector<8x16xf32>
    %28 = math.exp %27 : vector<8x16xf32>
    %cst_12 = arith.constant 1.000000e+00 : f32
    %29 = vector.broadcast %cst_12 : f32 to vector<8x16xf32>
    %30 = arith.addf %29, %28 : vector<8x16xf32>
    %31 = arith.divf %29, %30 : vector<8x16xf32>
    %32 = arith.select %26, %31, %20 : vector<8x16xi1>, vector<8x16xf32>
    %c0_13 = arith.constant 0 : index
    %c0_14 = arith.constant 0 : index
    %33 = vector.load %arg3[%c0_13, %c0_14] : memref<8x16xf32, #tpu.memory_space<vmem>>, vector<8x16xf32>
    tpu.vector_store %arg3[%c0_13, %c0_14], %32 {strides = array<i32>} : memref<8x16xf32, #tpu.memory_space<vmem>>, vector<8x16xf32>,
    return
  }
  func.func @transform_0(%arg0: i32) -> (i32, i32) {
    %c0_i32 = arith.constant 0 : i32
    %c0_i32_0 = arith.constant 0 : i32
    return %arg0, %c0_i32 : i32, i32
  }
  func.func @transform_1(%arg0: i32) -> (i32, i32) {
    %c0_i32 = arith.constant 0 : i32
    %c0_i32_0 = arith.constant 0 : i32
    %c0_i32_1 = arith.constant 0 : i32
    return %c0_i32, %c0_i32_0 : i32, i32
  }
  func.func @transform_2(%arg0: i32) -> (i32, i32) {
    %c0_i32 = arith.constant 0 : i32
    %c0_i32_0 = arith.constant 0 : i32
    return %arg0, %c0_i32 : i32, i32
  }
}

</mosaic_0001>

<llo_original>
// kernel: combined_agent_forward.1
$region0: #{combined_agent_forward.1}
  #allocation0 [shape = 'u32[]', space=smem, size = 0x4, offset = 0x4, fixed_abs, tag = 'smem constant byte address 0x4 - core index']
  #allocation1 [shape = 'u32[144,128]{1,0:T(1,128)}', space=vmem, size = 0x12000, scoped, tag = 'internal scratch']
  %s0 = inlined_call_operand.hbm [shape: f32[8,8], index: 0, kind: input, shape index: {}]
  %s1 = inlined_call_operand.hbm [shape: f32[288,128], index: 1, kind: input, shape index: {}]
  %s2 = inlined_call_operand.vmem [shape: f32[8,16], index: 2, kind: output, shape index: {}]
  %s3 = sld [smem:[#allocation0]]
  $region26: #{combined_agent_forward.1} parent=0
    _
  %s5 = ssub.s32 1, %s3
  %s6 = scalar_select 0, %s5, %s3
  $region1: #{combined_agent_forward.1} parent=0
    #allocation2 [shape = 'u8[4096]{0}', space=vmem, size = 0x1000, scoped, tag = 'input window, operand 0, single buffered']
    #allocation3 [shape = 's32[1]{0}', space=sflag, size = 0x4, scoped, tag = 'scoped memory for combined_agent_forward.1']
    #allocation4 [shape = 'u8[147456]{0}', space=vmem, size = 0x24000, scoped, tag = 'input window, operand 1, single buffered']
    #allocation5 [shape = 's32[1]{0}', space=sflag, size = 0x4, scoped, tag = 'scoped memory for combined_agent_forward.1']
    %7 = vsyncpa [#allocation3], 0
    %8 = vsyncpa [#allocation5], 0
    // Predicated region
    $region2: #{combined_agent_forward.1} parent=1 // pred_check
      _
    $region3: #{combined_agent_forward.1} parent=1 // pred_check_branch
      %10 = sbr.rel (0) target = $region5
    $region4: #{combined_agent_forward.1} parent=1 // pred_region
      %s12 = ssub.s32 128, 128
      %13 = vsyncadd [#allocation3], %s12
      %s15 = sshll.u32 [#allocation2], 4
      %s16 = int_to_ptr.vmem [resolvable:$true] %s15
      %18 = dma.hbm_to_vmem [thread:$0]  %s0, 128, %s16, [#allocation3]
    $region5: #{combined_agent_forward.1} parent=1 // pred_fallthru
      _
    // Predicated region
    $region6: #{combined_agent_forward.1} parent=1 // pred_check
      _
    $region7: #{combined_agent_forward.1} parent=1 // pred_check_branch
      %20 = sbr.rel (0) target = $region9
    $region8: #{combined_agent_forward.1} parent=1 // pred_region
      %s22 = ssub.s32 4608, 4608
      %23 = vsyncadd [#allocation5], %s22
      %s24 = sshll.u32 [#allocation4], 4
      %s25 = int_to_ptr.vmem [resolvable:$true] %s24
      %30 = dma.hbm_to_vmem [thread:$0]  %s1, 4608, %s25, [#allocation5], 128, 128, 8
    $region9: #{combined_agent_forward.1} parent=1 // pred_fallthru
      _
    // Predicated region
    $region10: #{combined_agent_forward.1} parent=1 // pred_check
      _
    $region11: #{combined_agent_forward.1} parent=1 // pred_check_branch
      %32 = sbr.rel (0) target = $region13
    $region12: #{combined_agent_forward.1} parent=1 // pred_region
      %33 = dma.done [#allocation3], 128
    $region13: #{combined_agent_forward.1} parent=1 // pred_fallthru
      _
    // Predicated region
    $region14: #{combined_agent_forward.1} parent=1 // pred_check
      _
    $region15: #{combined_agent_forward.1} parent=1 // pred_check_branch
      %35 = sbr.rel (0) target = $region17
    $region16: #{combined_agent_forward.1} parent=1 // pred_region
      %36 = dma.done [#allocation5], 4608
    $region17: #{combined_agent_forward.1} parent=1 // pred_fallthru
      _
    %v37 = vld [vmem:[#allocation4] sm:$0xff]
    %v38 = vld [vmem:[#allocation4 + $0x8] sm:$0x1]
    %v39 = vld [vmem:[#allocation4 + $0x10] sm:$0xff]
    %v40 = vld [vmem:[#allocation4 + $0x18] sm:$0xff]
    %v41 = vld [vmem:[#allocation4 + $0x20] sm:$0xff]
    %v42 = vld [vmem:[#allocation4 + $0x28] sm:$0xff]
    %v43 = vld [vmem:[#allocation4 + $0x30] sm:$0xff]
    %v44 = vld [vmem:[#allocation4 + $0x38] sm:$0xff]
    %v45 = vld [vmem:[#allocation4 + $0x40] sm:$0xff]
    %v46 = vld [vmem:[#allocation4 + $0x48] sm:$0xff]
    %v47 = vld [vmem:[#allocation4 + $0x50] sm:$0xff]
    %v48 = vld [vmem:[#allocation4 + $0x58] sm:$0xff]
    %v49 = vld [vmem:[#allocation4 + $0x60] sm:$0xff]
    %v50 = vld [vmem:[#allocation4 + $0x68] sm:$0xff]
    %v51 = vld [vmem:[#allocation4 + $0x70] sm:$0xff]
    %v52 = vld [vmem:[#allocation4 + $0x78] sm:$0xff]
    %v53 = vld [vmem:[#allocation4 + $0x80] sm:$0xff]
    %v54 = vld [vmem:[#allocation4 + $0x88] sm:$0xff]
    %v55 = vld [vmem:[#allocation4 + $0x90] sm:$0x1]
    %v56 = vld [vmem:[#allocation4 + $0x98] sm:$0xff]
    %v57 = vld [vmem:[#allocation4 + $0xa0] sm:$0xff]
    %v58 = vld [vmem:[#allocation4 + $0xa8] sm:$0xff]
    %v59 = vld [vmem:[#allocation4 + $0xb0] sm:$0xff]
    %v60 = vld [vmem:[#allocation4 + $0xb8] sm:$0xff]
    %v61 = vld [vmem:[#allocation4 + $0xc0] sm:$0xff]
    %v62 = vld [vmem:[#allocation4 + $0xc8] sm:$0xff]
    %v63 = vld [vmem:[#allocation4 + $0xd0] sm:$0xff]
    %v64 = vld [vmem:[#allocation4 + $0xd8] sm:$0xff]
    %v65 = vld [vmem:[#allocation4 + $0xe0] sm:$0xff]
    %v66 = vld [vmem:[#allocation4 + $0xe8] sm:$0xff]
    %v67 = vld [vmem:[#allocation4 + $0xf0] sm:$0xff]
    %v68 = vld [vmem:[#allocation4 + $0xf8] sm:$0xff]
    %v69 = vld [vmem:[#allocation4 + $0x100] sm:$0xff]
    %v70 = vld [vmem:[#allocation4 + $0x108] sm:$0xff]
    %v71 = vld [vmem:[#allocation4 + $0x110] sm:$0xff]
    %v72 = vld [vmem:[#allocation4 + $0x118] sm:$0x1]
    %v73 = vld [vmem:[#allocation2] sm:$0xff]
    %v74 = vlaneseq
    %v75 = vshrl.u32 %v74, 7
    %v76 = vsub.s32 0, %v75
    %v77 = vrot.slane %v38, %v76
    %vm78 = vcmask 64512
    %v80 = vsel %vm78, %v73, 0
    %82 = vmatprep.subr.mxu0 0.0
    %83 = vmatpush1.msra.mxu0 0.0
    %84 = vmatprep.subr.mxu0 0.0
    %85 = vmatpush1.msra.mxu0 0.0
    %86 = vmatprep.subr.mxu0 0.0
    %87 = vmatpush1.msra.mxu0 0.0
    %88 = vmatprep.subr.mxu0 0.0
    %89 = vmatpush1.msra.mxu0 0.0
    %90 = vmatprep.subr.mxu0 0.0
    %91 = vmatpush1.msra.mxu0 0.0
    %92 = vmatprep.subr.mxu0 0.0
    %93 = vmatpush1.msra.mxu0 0.0
    %94 = vmatprep.subr.mxu0 0.0
    %95 = vmatpush1.msra.mxu0 0.0
    %96 = vmatprep.subr.mxu0 0.0
    %97 = vmatpush1.msra.mxu0 0.0
    %98 = vmatprep.subr.mxu0 0.0
    %99 = vmatpush1.msra.mxu0 0.0
    %100 = vmatprep.subr.mxu0 0.0
    %101 = vmatpush1.msra.mxu0 0.0
    %102 = vmatprep.subr.mxu0 0.0
    %103 = vmatpush1.msra.mxu0 0.0
    %104 = vmatprep.subr.mxu0 0.0
    %105 = vmatpush1.msra.mxu0 0.0
    %106 = vmatprep.subr.mxu0 0.0
    %107 = vmatpush1.msra.mxu0 0.0
    %108 = vmatprep.subr.mxu0 0.0
    %109 = vmatpush1.msra.mxu0 0.0
    %110 = vmatprep.subr.mxu0 0.0
    %111 = vmatpush1.msra.mxu0 0.0
    %112 = vmatprep.subr.mxu0 0.0
    %113 = vmatpush1.msra.mxu0 %v37
    %114 = vmatprep.subr.mxu0 0.0
    %115 = vmatpush2.msra.mxu0 0.0
    %116 = vmatprep.subr.mxu0 0.0
    %117 = vmatpush2.msra.mxu0 0.0
    %118 = vmatprep.subr.mxu0 0.0
    %119 = vmatpush2.msra.mxu0 0.0
    %120 = vmatprep.subr.mxu0 0.0
    %121 = vmatpush2.msra.mxu0 0.0
    %122 = vmatprep.subr.mxu0 0.0
    %123 = vmatpush2.msra.mxu0 0.0
    %124 = vmatprep.subr.mxu0 0.0
    %125 = vmatpush2.msra.mxu0 0.0
    %126 = vmatprep.subr.mxu0 0.0
    %127 = vmatpush2.msra.mxu0 0.0
    %128 = vmatprep.subr.mxu0 0.0
    %129 = vmatpush2.msra.mxu0 0.0
    %130 = vmatprep.subr.mxu0 0.0
    %131 = vmatpush2.msra.mxu0 0.0
    %132 = vmatprep.subr.mxu0 0.0
    %133 = vmatpush2.msra.mxu0 0.0
    %134 = vmatprep.subr.mxu0 0.0
    %135 = vmatpush2.msra.mxu0 0.0
    %136 = vmatprep.subr.mxu0 0.0
    %137 = vmatpush2.msra.mxu0 0.0
    %138 = vmatprep.subr.mxu0 0.0
    %139 = vmatpush2.msra.mxu0 0.0
    %140 = vmatprep.subr.mxu0 0.0
    %141 = vmatpush2.msra.mxu0 0.0
    %142 = vmatprep.subr.mxu0 0.0
    %143 = vmatpush2.msra.mxu0 0.0
    %144 = vmatprep.subr.mxu0 0.0
    %145 = vmatpush2.msra.mxu0 0.0
    %146 = vmatprep.mubr.f32.mxu0 0.0
    %147 = vmatmul.mubr.f32.gmra.mxu0 %v80
    %v148 = vpop.f32.mrf.mxu0
    %v149 = vadd.f32 %v77, %v148
    %v150 = vpop.f32.mrf.mxu0
    %151 = vdwg.mxu0
    %v152 = vmax.f32 %v149, 0.0
    %v153 = vlaneseq
    %v154 = vshrl.u32 %v153, 7
    %v155 = vsub.s32 0, %v154
    %v156 = vrot.slane %v55, %v155
    %157 = vmatprep.subr.mxu0 0.0
    %158 = vmatpush1.msra.mxu0 %v54
    %159 = vmatprep.subr.mxu0 0.0
    %160 = vmatpush1.msra.mxu0 %v53
    %161 = vmatprep.subr.mxu0 0.0
    %162 = vmatpush1.msra.mxu0 %v52
    %163 = vmatprep.subr.mxu0 0.0
    %164 = vmatpush1.msra.mxu0 %v51
    %165 = vmatprep.subr.mxu0 0.0
    %166 = vmatpush1.msra.mxu0 %v50
    %167 = vmatprep.subr.mxu0 0.0
    %168 = vmatpush1.msra.mxu0 %v49
    %169 = vmatprep.subr.mxu0 0.0
    %170 = vmatpush1.msra.mxu0 %v48
    %171 = vmatprep.subr.mxu0 0.0
    %172 = vmatpush1.msra.mxu0 %v47
    %173 = vmatprep.subr.mxu0 0.0
    %174 = vmatpush1.msra.mxu0 %v46
    %175 = vmatprep.subr.mxu0 0.0
    %176 = vmatpush1.msra.mxu0 %v45
    %177 = vmatprep.subr.mxu0 0.0
    %178 = vmatpush1.msra.mxu0 %v44
    %179 = vmatprep.subr.mxu0 0.0
    %180 = vmatpush1.msra.mxu0 %v43
    %181 = vmatprep.subr.mxu0 0.0
    %182 = vmatpush1.msra.mxu0 %v42
    %183 = vmatprep.subr.mxu0 0.0
    %184 = vmatpush1.msra.mxu0 %v41
    %185 = vmatprep.subr.mxu0 0.0
    %186 = vmatpush1.msra.mxu0 %v40
    %187 = vmatprep.subr.mxu0 0.0
    %188 = vmatpush1.msra.mxu0 %v39
    %189 = vmatprep.subr.mxu0 0.0
    %190 = vmatpush2.msra.mxu0 0.0
    %191 = vmatprep.subr.mxu0 0.0
    %192 = vmatpush2.msra.mxu0 0.0
    %193 = vmatprep.subr.mxu0 0.0
    %194 = vmatpush2.msra.mxu0 0.0
    %195 = vmatprep.subr.mxu0 0.0
    %196 = vmatpush2.msra.mxu0 0.0
    %197 = vmatprep.subr.mxu0 0.0
    %198 = vmatpush2.msra.mxu0 0.0
    %199 = vmatprep.subr.mxu0 0.0
    %200 = vmatpush2.msra.mxu0 0.0
    %201 = vmatprep.subr.mxu0 0.0
    %202 = vmatpush2.msra.mxu0 0.0
    %203 = vmatprep.subr.mxu0 0.0
    %204 = vmatpush2.msra.mxu0 0.0
    %205 = vmatprep.subr.mxu0 0.0
    %206 = vmatpush2.msra.mxu0 0.0
    %207 = vmatprep.subr.mxu0 0.0
    %208 = vmatpush2.msra.mxu0 0.0
    %209 = vmatprep.subr.mxu0 0.0
    %210 = vmatpush2.msra.mxu0 0.0
    %211 = vmatprep.subr.mxu0 0.0
    %212 = vmatpush2.msra.mxu0 0.0
    %213 = vmatprep.subr.mxu0 0.0
    %214 = vmatpush2.msra.mxu0 0.0
    %215 = vmatprep.subr.mxu0 0.0
    %216 = vmatpush2.msra.mxu0 0.0
    %217 = vmatprep.subr.mxu0 0.0
    %218 = vmatpush2.msra.mxu0 0.0
    %219 = vmatprep.subr.mxu0 0.0
    %220 = vmatpush2.msra.mxu0 0.0
    %221 = vmatprep.mubr.f32.mxu0 0.0
    %222 = vmatmul.mubr.f32.gmra.mxu0 %v152
    %v223 = vpop.f32.mrf.mxu0
    %v224 = vadd.f32 %v156, %v223
    %v225 = vpop.f32.mrf.mxu0
    %226 = vdwg.mxu0
    %v227 = vmax.f32 %v224, 0.0
    %v228 = vlaneseq
    %v229 = vshrl.u32 %v228, 7
    %v230 = vsub.s32 0, %v229
    %v231 = vrot.slane %v72, %v230
    %232 = vmatprep.subr.mxu0 0.0
    %233 = vmatpush1.msra.mxu0 %v71
    %234 = vmatprep.subr.mxu0 0.0
    %235 = vmatpush1.msra.mxu0 %v70
    %236 = vmatprep.subr.mxu0 0.0
    %237 = vmatpush1.msra.mxu0 %v69
    %238 = vmatprep.subr.mxu0 0.0
    %239 = vmatpush1.msra.mxu0 %v68
    %240 = vmatprep.subr.mxu0 0.0
    %241 = vmatpush1.msra.mxu0 %v67
    %242 = vmatprep.subr.mxu0 0.0
    %243 = vmatpush1.msra.mxu0 %v66
    %244 = vmatprep.subr.mxu0 0.0
    %245 = vmatpush1.msra.mxu0 %v65
    %246 = vmatprep.subr.mxu0 0.0
    %247 = vmatpush1.msra.mxu0 %v64
    %248 = vmatprep.subr.mxu0 0.0
    %249 = vmatpush1.msra.mxu0 %v63
    %250 = vmatprep.subr.mxu0 0.0
    %251 = vmatpush1.msra.mxu0 %v62
    %252 = vmatprep.subr.mxu0 0.0
    %253 = vmatpush1.msra.mxu0 %v61
    %254 = vmatprep.subr.mxu0 0.0
    %255 = vmatpush1.msra.mxu0 %v60
    %256 = vmatprep.subr.mxu0 0.0
    %257 = vmatpush1.msra.mxu0 %v59
    %258 = vmatprep.subr.mxu0 0.0
    %259 = vmatpush1.msra.mxu0 %v58
    %260 = vmatprep.subr.mxu0 0.0
    %261 = vmatpush1.msra.mxu0 %v57
    %262 = vmatprep.subr.mxu0 0.0
    %263 = vmatpush1.msra.mxu0 %v56
    %264 = vmatprep.subr.mxu0 0.0
    %265 = vmatpush2.msra.mxu0 0.0
    %266 = vmatprep.subr.mxu0 0.0
    %267 = vmatpush2.msra.mxu0 0.0
    %268 = vmatprep.subr.mxu0 0.0
    %269 = vmatpush2.msra.mxu0 0.0
    %270 = vmatprep.subr.mxu0 0.0
    %271 = vmatpush2.msra.mxu0 0.0
    %272 = vmatprep.subr.mxu0 0.0
    %273 = vmatpush2.msra.mxu0 0.0
    %274 = vmatprep.subr.mxu0 0.0
    %275 = vmatpush2.msra.mxu0 0.0
    %276 = vmatprep.subr.mxu0 0.0
    %277 = vmatpush2.msra.mxu0 0.0
    %278 = vmatprep.subr.mxu0 0.0
    %279 = vmatpush2.msra.mxu0 0.0
    %280 = vmatprep.subr.mxu0 0.0
    %281 = vmatpush2.msra.mxu0 0.0
    %282 = vmatprep.subr.mxu0 0.0
    %283 = vmatpush2.msra.mxu0 0.0
    %284 = vmatprep.subr.mxu0 0.0
    %285 = vmatpush2.msra.mxu0 0.0
    %286 = vmatprep.subr.mxu0 0.0
    %287 = vmatpush2.msra.mxu0 0.0
    %288 = vmatprep.subr.mxu0 0.0
    %289 = vmatpush2.msra.mxu0 0.0
    %290 = vmatprep.subr.mxu0 0.0
    %291 = vmatpush2.msra.mxu0 0.0
    %292 = vmatprep.subr.mxu0 0.0
    %293 = vmatpush2.msra.mxu0 0.0
    %294 = vmatprep.subr.mxu0 0.0
    %295 = vmatpush2.msra.mxu0 0.0
    %296 = vmatprep.mubr.f32.mxu0 0.0
    %297 = vmatmul.mubr.f32.gmra.mxu0 %v227
    %v298 = vpop.f32.mrf.mxu0
    %v299 = vadd.f32 %v231, %v298
    %v300 = vpop.f32.mrf.mxu0
    %301 = vdwg.mxu0
    %v302 = vlaneseq
    %v303 = vand.u32 %v302, 127
    %vm304 = vcmp.ge.s32.totalorder %v303, 4
    %vm305 = vcmp.lt.s32.totalorder %v303, 8
    %vm306 = vmand %vm304, %vm305
    %v307 = vxor.u32 %v299, 2147483648
    %v308 = vmul.f32 %v307, 1.442695
    %v309 = vpow.pop %v308
    %v310 = vadd.f32 %v309, 1.0
    %v311 = vrcp.pop %v310
    %v312 = vmul.f32 1.0, %v311
    %v313 = vsel %vm306, %v312, %v299
    %vm314 = vcmask 130048
    %315 = vst.msk [vmem:[%s2] sm:$0xff] %vm314, %v313
    // Predicated region
    $region18: #{combined_agent_forward.1} parent=1 // pred_check
      _
    $region19: #{combined_agent_forward.1} parent=1 // pred_check_branch
      %317 = sbr.rel (0) target = $region21
    $region20: #{combined_agent_forward.1} parent=1 // pred_region
      _
    $region21: #{combined_agent_forward.1} parent=1 // pred_fallthru
      _
    // Predicated region
    $region22: #{combined_agent_forward.1} parent=1 // pred_check
      _
    $region23: #{combined_agent_forward.1} parent=1 // pred_check_branch
      %319 = sbr.rel (0) target = $region25
    $region24: #{combined_agent_forward.1} parent=1 // pred_region
      _
    $region25: #{combined_agent_forward.1} parent=1 // pred_fallthru
      _
    %320 = vsyncpa [#allocation3], 1
    %321 = vsyncpa [#allocation5], 1

</llo_original>
